<compile_context>
chip_gen: v7x
topology: tpu7x:2x2x1
jax: 0.10.0
libtpu: 0.0.40
codegen_flags: <defaults>
</compile_context>

<pallas_src>
import functools

import jax
import jax.numpy as jnp
from jax.experimental import pallas as pl
from jax.experimental.pallas import tpu as pltpu


def _round_up(n, m):
    return ((n + m - 1) // m) * m


# ---------------------------------------------------------------------------
# Kernel body: fused fc1 -> relu -> fc2 -> relu -> fc3 [-> sigmoid]
# ---------------------------------------------------------------------------
def _mlp_kernel(x_ref, w1_ref, b1_ref, w2_ref, b2_ref, w3_ref, b3_ref, o_ref,
                *, binary: bool, reduce_out: bool, lane_dense: bool):
    # x arrives as f32 (no wrapper-side cast / extra HBM pass); cast to bf16 on the VPU
    # right before feeding the MXU.
    x = x_ref[...].astype(jnp.bfloat16)
    h1 = jnp.dot(x, w1_ref[...], preferred_element_type=jnp.float32) + b1_ref[...]
    h1 = jnp.maximum(h1, 0.0)
    h2 = jnp.dot(h1.astype(jnp.bfloat16), w2_ref[...],
                 preferred_element_type=jnp.float32) + b2_ref[...]
    h2 = jnp.maximum(h2, 0.0)
    if reduce_out:
        # output_dim == 1: VPU multiply + XLU lane reduction against the (1, E) f32 row
        # of W3 instead of a lane-sparse N=1 MXU matmul.
        col = jnp.sum(h2 * w3_ref[...], axis=-1, keepdims=True)        # (TB, 1)
        if lane_dense:
            # Relayout to a lane-dense (1, TB) row so the output store is an unmasked,
            # lane-dense vst instead of TB/8 masked column stores.
            out = jnp.transpose(col, (1, 0)) + b3_ref[...]              # (1, TB)
        else:
            out = col + b3_ref[...]                                     # (TB, 1)
    else:
        out = jnp.dot(h2.astype(jnp.bfloat16), w3_ref[...],
                      preferred_element_type=jnp.float32) + b3_ref[...]
    if binary:
        out = jax.nn.sigmoid(out)
    o_ref[...] = out.astype(o_ref.dtype)


# ---------------------------------------------------------------------------
# Parameter preparation (hoisted dtype casts — call once, reuse every forward)
# ---------------------------------------------------------------------------
def prepare_params(params):
    """Cast weights to kernel-ready dtypes once (MXU inputs bf16, biases f32)."""
    E = params["w1"].shape[1]
    O = params["w3"].shape[1] if params["w3"].ndim == 2 else 1
    p = {
        "w1": jnp.asarray(params["w1"], jnp.bfloat16),
        "w2": jnp.asarray(params["w2"], jnp.bfloat16),
        "b1": jnp.asarray(params["b1"], jnp.float32).reshape(1, E),
        "b2": jnp.asarray(params["b2"], jnp.float32).reshape(1, E),
        "b3": jnp.asarray(params["b3"], jnp.float32).reshape(1, O),
    }
    if O == 1:
        # (E, 1) -> (1, E) f32 row for the VPU/XLU reduction head.
        p["w3"] = jnp.asarray(params["w3"], jnp.float32).reshape(1, E)
    else:
        p["w3"] = jnp.asarray(params["w3"], jnp.bfloat16)
    return p


# ---------------------------------------------------------------------------
# Tiling / VMEM budgeting
# ---------------------------------------------------------------------------
_VMEM_TILE_BUDGET = 40 * 1024 * 1024   # conservative per-step budget; fits v7x's 64 MiB


def _vmem_step_bytes(TB, D, E, O, reduce_out, single_buffer_weights):
    wbuf = 1 if single_buffer_weights else 2
    w3_bytes = E * 4 if reduce_out else E * O * 2
    return (2 * TB * D * 4                                        # x (f32), double-buffered
            + wbuf * (D * E * 2 + E * E * 2 + w3_bytes + 2 * E * 4 + O * 4)
            + 2 * TB * E * 4                                      # h1 / h2 f32 intermediates
            + 2 * TB * max(O, 1) * 4                              # output buffers
            + (1 << 20))                                          # compiler scratch slack


def _choose_tile(B, D, E, O, reduce_out, block_batch):
    if block_batch is not None:
        return max(8, min(_round_up(block_batch, 8), _round_up(B, 8)))
    if B <= 256:
        return B                     # single grid step; blocks equal full array dims
    # Multi-tile: largest lane-aligned tile fitting the VMEM budget, capped at 1024,
    # and split so the grid has >= 2 steps (two v7x TensorCores both get work).
    TB = 1024
    while TB > 128 and _vmem_step_bytes(TB, D, E, O, reduce_out, False) > _VMEM_TILE_BUDGET:
        TB //= 2
    TB = min(TB, _round_up(pl.cdiv(B, 2), 128))
    return max(TB, 128)


# ---------------------------------------------------------------------------
# pallas_call builder
# ---------------------------------------------------------------------------
def _run_kernel(x, p, *, binary, TB, lane_dense, single_buffer, vmem_limit):
    B, D = x.shape
    E = p["w1"].shape[1]
    O = p["b3"].shape[1]
    reduce_out = (O == 1)
    lane_dense = bool(reduce_out and lane_dense)
    grid = (pl.cdiv(B, TB),)

    resident_kw = {"pipeline_mode": pl.Buffered(1)} if single_buffer else {}

    in_specs = [
        pl.BlockSpec((TB, D), lambda i: (i, 0)),                       # x: moves with tile
        pl.BlockSpec((D, E), lambda i: (0, 0), **resident_kw),         # w1: resident
        pl.BlockSpec((1, E), lambda i: (0, 0), **resident_kw),         # b1
        pl.BlockSpec((E, E), lambda i: (0, 0), **resident_kw),         # w2: resident
        pl.BlockSpec((1, E), lambda i: (0, 0), **resident_kw),         # b2
        (pl.BlockSpec((1, E), lambda i: (0, 0), **resident_kw) if reduce_out
         else pl.BlockSpec((E, O), lambda i: (0, 0), **resident_kw)),  # w3
        pl.BlockSpec((1, O), lambda i: (0, 0), **resident_kw),         # b3
    ]

    if lane_dense:
        out_shape = jax.ShapeDtypeStruct((1, B), jnp.float32)
        out_spec = pl.BlockSpec((1, TB), lambda i: (0, i))
    else:
        out_shape = jax.ShapeDtypeStruct((B, O), jnp.float32)
        out_spec = pl.BlockSpec((TB, O), lambda i: (i, 0))

    w3_bytes = E * 4 if reduce_out else E * O * 2
    cost = pl.CostEstimate(
        flops=2 * B * (D * E + E * E + E * O),
        transcendentals=(B * O) if binary else 0,
        bytes_accessed=(B * D * 4                  # x (f32)
                        + D * E * 2 + E * E * 2    # w1, w2 (bf16)
                        + 2 * E * 4 + O * 4        # biases (f32)
                        + w3_bytes
                        + B * O * 4),              # out (f32)
    )

    kernel = functools.partial(_mlp_kernel, binary=binary,
                               reduce_out=reduce_out, lane_dense=lane_dense)

    out = pl.pallas_call(
        kernel,
        out_shape=out_shape,
        grid_spec=pltpu.PrefetchScalarGridSpec(
            num_scalar_prefetch=0,
            grid=grid,
            in_specs=in_specs,
            out_specs=out_spec,
        ),
        compiler_params=pltpu.CompilerParams(
            dimension_semantics=("parallel",),       # batch tiles split across v7x TCs
            vmem_limit_bytes=vmem_limit,
        ),
        cost_estimate=cost,
    )(x, p["w1"], p["b1"], p["w2"], p["b2"], p["w3"], p["b3"])

    if lane_dense:
        out = out.reshape(B, 1)
    return out


def downstream_forward(x, params, *, binary: bool = False, block_batch=None):
    """Forward pass of DownstreamModel as a single fused, batch-tiled Pallas kernel.

    x: (B, input_dim) float32
    params: raw f32 params {w1,b1,w2,b2,w3,b3} or the output of prepare_params().
    """
    if params["w1"].dtype != jnp.bfloat16:
        params = prepare_params(params)   # prefer calling prepare_params once outside

    if x.dtype != jnp.float32:
        x = x.astype(jnp.float32)

    B, D = x.shape
    E = params["w1"].shape[1]
    O = params["b3"].shape[1]
    reduce_out = (O == 1)

    TB = _choose_tile(B, D, E, O, reduce_out, block_batch)
    grid_len = pl.cdiv(B, TB)
    # Lane-dense (1, B) output requires the lane-axis block to be 128-aligned unless it
    # covers the whole array.
    lane_dense = reduce_out and (grid_len == 1 or TB % 128 == 0)

    est = _vmem_step_bytes(TB, D, E, O, reduce_out, True)
    vmem_limit = int(min(64 << 20, max(32 << 20, 2 * est)))

    try:
        # Preferred config: single-buffered resident weights + lane-dense O==1 output.
        return _run_kernel(x, params, binary=binary, TB=TB,
                           lane_dense=lane_dense, single_buffer=True,
                           vmem_limit=vmem_limit)
    except Exception:
        # Conservative fallback (previously-validated layout) if this Pallas/Mosaic
        # build rejects Buffered(1) or the in-kernel (TB,1)->(1,TB) relayout.
        return _run_kernel(x, params, binary=binary, TB=TB,
                           lane_dense=False, single_buffer=False,
                           vmem_limit=vmem_limit)


# ---------------------------------------------------------------------------
# Reference + synthetic init + self-test
# ---------------------------------------------------------------------------
def init_params(key, input_dim, embedding_dim=256, output_dim=1):
    """Deterministic synthetic parameter init (PyTorch-style uniform fan-in bound)."""
    ks = jax.random.split(key, 6)

    def linear(kw, kb, fan_in, fan_out):
        bound = 1.0 / jnp.sqrt(fan_in)
        w = jax.random.uniform(kw, (fan_in, fan_out), jnp.float32, -bound, bound)
        b = jax.random.uniform(kb, (1, fan_out), jnp.float32, -bound, bound)
        return w, b

    w1, b1 = linear(ks[0], ks[1], input_dim, embedding_dim)
    w2, b2 = linear(ks[2], ks[3], embedding_dim, embedding_dim)
    w3, b3 = linear(ks[4], ks[5], embedding_dim, output_dim)
    return {"w1": w1, "b1": b1, "w2": w2, "b2": b2, "w3": w3, "b3": b3}


def reference_forward(x, params, *, binary: bool = False):
    h1 = jnp.maximum(x @ params["w1"] + params["b1"], 0.0)
    h2 = jnp.maximum(h1 @ params["w2"] + params["b2"], 0.0)
    out = h2 @ params["w3"] + params["b3"]
    if binary:
        out = jax.nn.sigmoid(out)
    return out


if __name__ == "__main__":
    key = jax.random.PRNGKey(0)
    k_x, k_p = jax.random.split(key)

    batch = 64
    input_dim = 32
    embedding_dim = 256
    output_dim = 1

    x = jax.random.normal(k_x, (batch, input_dim), jnp.float32)
    raw_params = init_params(k_p, input_dim, embedding_dim, output_dim)
    params = prepare_params(raw_params)   # hoisted weight casts (done once)

    # Small batch -> single grid step, weights resident, O==1 VPU/XLU head.
    out = jax.block_until_ready(downstream_forward(x, params, binary=False))
    ref = reference_forward(x, raw_params, binary=False)
    assert out.shape == (batch, output_dim)
    assert jnp.allclose(out, ref, atol=2e-2, rtol=2e-2)

    # Binary (sigmoid) head.
    out_bin = jax.block_until_ready(downstream_forward(x, params, binary=True))
    ref_bin = reference_forward(x, raw_params, binary=True)
    assert jnp.allclose(out_bin, ref_bin, atol=2e-2, rtol=2e-2)

    # Generic output_dim > 1 path (MXU fc3).
    raw_params3 = init_params(k_p, input_dim, embedding_dim, 3)
    out3 = jax.block_until_ready(downstream_forward(x, raw_params3, binary=False))
    ref3 = reference_forward(x, raw_params3, binary=False)
    assert out3.shape == (batch, 3)
    assert jnp.allclose(out3, ref3, atol=2e-2, rtol=2e-2)

    # Larger batch -> multi-step grid (>= 2 tiles), lane-dense O==1 output.
    batch_big = 512
    xb = jax.random.normal(k_x, (batch_big, input_dim), jnp.float32)
    outb = jax.block_until_ready(downstream_forward(xb, params, binary=False))
    refb = reference_forward(xb, raw_params, binary=False)
    assert outb.shape == (batch_big, 1)
    assert jnp.allclose(outb, refb, atol=2e-2, rtol=2e-2)

    print("KERNEL_OK")
</pallas_src>

<mosaic_0001>
module attributes {stable_mosaic.version = 11 : i64} {
  func.func @_mlp_kernel(%arg0: i32, %arg1: memref<64x32xf32, #tpu.memory_space<vmem>>, %arg2: memref<32x256xbf16, #tpu.memory_space<vmem>>, %arg3: memref<1x256xf32, #tpu.memory_space<vmem>>, %arg4: memref<256x256xbf16, #tpu.memory_space<vmem>>, %arg5: memref<1x256xf32, #tpu.memory_space<vmem>>, %arg6: memref<1x256xf32, #tpu.memory_space<vmem>>, %arg7: memref<1x1xf32, #tpu.memory_space<vmem>>, %arg8: memref<1x64xf32, #tpu.memory_space<vmem>>) attributes {dimension_semantics = [#tpu.dimension_semantics<parallel>], iteration_bounds = array<i64: 1>, scalar_prefetch = 0 : i64, scratch_operands = 0 : i64, tpu.core_type = #tpu.core_type<tc>, window_params = [{transform_indices = @transform_0, window_bounds = array<i64: 64, 32>}, {pipeline_mode = #tpu.pipeline_mode<synchronous>, transform_indices = @transform_1, window_bounds = array<i64: 32, 256>}, {pipeline_mode = #tpu.pipeline_mode<synchronous>, transform_indices = @transform_2, window_bounds = array<i64: 1, 256>}, {pipeline_mode = #tpu.pipeline_mode<synchronous>, transform_indices = @transform_3, window_bounds = array<i64: 256, 256>}, {pipeline_mode = #tpu.pipeline_mode<synchronous>, transform_indices = @transform_4, window_bounds = array<i64: 1, 256>}, {pipeline_mode = #tpu.pipeline_mode<synchronous>, transform_indices = @transform_5, window_bounds = array<i64: 1, 256>}, {pipeline_mode = #tpu.pipeline_mode<synchronous>, transform_indices = @transform_6, window_bounds = array<i64: 1, 1>}, {transform_indices = @transform_7, window_bounds = array<i64: 1, 64>}]} {
    %c0 = arith.constant 0 : index
    %c0_0 = arith.constant 0 : index
    %0 = vector.load %arg1[%c0, %c0_0] : memref<64x32xf32, #tpu.memory_space<vmem>>, vector<64x32xf32>
    %1 = arith.truncf %0 : vector<64x32xf32> to vector<64x32xbf16>
    %c0_1 = arith.constant 0 : index
    %c0_2 = arith.constant 0 : index
    %2 = vector.load %arg2[%c0_1, %c0_2] : memref<32x256xbf16, #tpu.memory_space<vmem>>, vector<32x256xbf16>
    %cst = arith.constant dense<0.000000e+00> : vector<64x256xf32>
    %3 = tpu.matmul %1, %2, %cst {dimension_numbers = #tpu.dot_dimension_numbers<[1], [0], [0], [1], [0, 0, 1, 1], [], []>} : vector<64x32xbf16>, vector<32x256xbf16>, vector<64x256xf32> -> vector<64x256xf32>
    %c0_3 = arith.constant 0 : index
    %c0_4 = arith.constant 0 : index
    %4 = vector.load %arg3[%c0_3, %c0_4] : memref<1x256xf32, #tpu.memory_space<vmem>>, vector<1x256xf32>
    %5 = vector.broadcast %4 : vector<1x256xf32> to vector<64x256xf32>
    %6 = arith.addf %3, %5 : vector<64x256xf32>
    %cst_5 = arith.constant 0.000000e+00 : f32
    %7 = vector.broadcast %cst_5 : f32 to vector<64x256xf32>
    %8 = arith.maximumf %6, %7 : vector<64x256xf32>
    %9 = arith.truncf %8 : vector<64x256xf32> to vector<64x256xbf16>
    %c0_6 = arith.constant 0 : index
    %c0_7 = arith.constant 0 : index
    %10 = vector.load %arg4[%c0_6, %c0_7] : memref<256x256xbf16, #tpu.memory_space<vmem>>, vector<256x256xbf16>
    %cst_8 = arith.constant dense<0.000000e+00> : vector<64x256xf32>
    %11 = tpu.matmul %9, %10, %cst_8 {dimension_numbers = #tpu.dot_dimension_numbers<[1], [0], [0], [1], [0, 0, 1, 1], [], []>} : vector<64x256xbf16>, vector<256x256xbf16>, vector<64x256xf32> -> vector<64x256xf32>
    %c0_9 = arith.constant 0 : index
    %c0_10 = arith.constant 0 : index
    %12 = vector.load %arg5[%c0_9, %c0_10] : memref<1x256xf32, #tpu.memory_space<vmem>>, vector<1x256xf32>
    %13 = vector.broadcast %12 : vector<1x256xf32> to vector<64x256xf32>
    %14 = arith.addf %11, %13 : vector<64x256xf32>
    %cst_11 = arith.constant 0.000000e+00 : f32
    %15 = vector.broadcast %cst_11 : f32 to vector<64x256xf32>
    %16 = arith.maximumf %14, %15 : vector<64x256xf32>
    %c0_12 = arith.constant 0 : index
    %c0_13 = arith.constant 0 : index
    %17 = vector.load %arg6[%c0_12, %c0_13] : memref<1x256xf32, #tpu.memory_space<vmem>>, vector<1x256xf32>
    %18 = vector.broadcast %17 : vector<1x256xf32> to vector<64x256xf32>
    %19 = arith.mulf %16, %18 : vector<64x256xf32>
    %cst_14 = arith.constant dense<0.000000e+00> : vector<64xf32>
    %20 = vector.multi_reduction <add>, %19, %cst_14 [1] : vector<64x256xf32> to vector<64xf32>
    %21 = vector.shape_cast %20 : vector<64xf32> to vector<64x1xf32>
    %22 = tpu.transpose %21, [1, 0] : vector<64x1xf32> -> vector<1x64xf32>
    %c0_15 = arith.constant 0 : index
    %c0_16 = arith.constant 0 : index
    %23 = vector.load %arg7[%c0_15, %c0_16] : memref<1x1xf32, #tpu.memory_space<vmem>>, vector<1x1xf32>
    %24 = vector.broadcast %23 : vector<1x1xf32> to vector<1x64xf32>
    %25 = arith.addf %22, %24 : vector<1x64xf32>
    %c0_17 = arith.constant 0 : index
    %c0_18 = arith.constant 0 : index
    %26 = vector.load %arg8[%c0_17, %c0_18] : memref<1x64xf32, #tpu.memory_space<vmem>>, vector<1x64xf32>
    tpu.vector_store %arg8[%c0_17, %c0_18], %25 {strides = array<i32>} : memref<1x64xf32, #tpu.memory_space<vmem>>, vector<1x64xf32>,
    return
  }
  func.func @transform_0(%arg0: i32) -> (i32, i32) {
    %c0_i32 = arith.constant 0 : i32
    %c0_i32_0 = arith.constant 0 : i32
    return %arg0, %c0_i32 : i32, i32
  }
  func.func @transform_1(%arg0: i32) -> (i32, i32) {
    %c0_i32 = arith.constant 0 : i32
    %c0_i32_0 = arith.constant 0 : i32
    %c0_i32_1 = arith.constant 0 : i32
    return %c0_i32, %c0_i32_0 : i32, i32
  }
  func.func @transform_2(%arg0: i32) -> (i32, i32) {
    %c0_i32 = arith.constant 0 : i32
    %c0_i32_0 = arith.constant 0 : i32
    %c0_i32_1 = arith.constant 0 : i32
    return %c0_i32, %c0_i32_0 : i32, i32
  }
  func.func @transform_3(%arg0: i32) -> (i32, i32) {
    %c0_i32 = arith.constant 0 : i32
    %c0_i32_0 = arith.constant 0 : i32
    %c0_i32_1 = arith.constant 0 : i32
    return %c0_i32, %c0_i32_0 : i32, i32
  }
  func.func @transform_4(%arg0: i32) -> (i32, i32) {
    %c0_i32 = arith.constant 0 : i32
    %c0_i32_0 = arith.constant 0 : i32
    %c0_i32_1 = arith.constant 0 : i32
    return %c0_i32, %c0_i32_0 : i32, i32
  }
  func.func @transform_5(%arg0: i32) -> (i32, i32) {
    %c0_i32 = arith.constant 0 : i32
    %c0_i32_0 = arith.constant 0 : i32
    %c0_i32_1 = arith.constant 0 : i32
    return %c0_i32, %c0_i32_0 : i32, i32
  }
  func.func @transform_6(%arg0: i32) -> (i32, i32) {
    %c0_i32 = arith.constant 0 : i32
    %c0_i32_0 = arith.constant 0 : i32
    %c0_i32_1 = arith.constant 0 : i32
    return %c0_i32, %c0_i32_0 : i32, i32
  }
  func.func @transform_7(%arg0: i32) -> (i32, i32) {
    %c0_i32 = arith.constant 0 : i32
    %c0_i32_0 = arith.constant 0 : i32
    return %c0_i32, %arg0 : i32, i32
  }
}

module attributes {stable_mosaic.version = 11 : i64} {
  func.func @_mlp_kernel(%arg0: i32, %arg1: memref<64x32xf32, #tpu.memory_space<vmem>>, %arg2: memref<32x256xbf16, #tpu.memory_space<vmem>>, %arg3: memref<1x256xf32, #tpu.memory_space<vmem>>, %arg4: memref<256x256xbf16, #tpu.memory_space<vmem>>, %arg5: memref<1x256xf32, #tpu.memory_space<vmem>>, %arg6: memref<1x256xf32, #tpu.memory_space<vmem>>, %arg7: memref<1x1xf32, #tpu.memory_space<vmem>>, %arg8: memref<64x1xf32, #tpu.memory_space<vmem>>) attributes {dimension_semantics = [#tpu.dimension_semantics<parallel>], iteration_bounds = array<i64: 1>, scalar_prefetch = 0 : i64, scratch_operands = 0 : i64, tpu.core_type = #tpu.core_type<tc>, window_params = [{transform_indices = @transform_0, window_bounds = array<i64: 64, 32>}, {pipeline_mode = #tpu.pipeline_mode<synchronous>, transform_indices = @transform_1, window_bounds = array<i64: 32, 256>}, {pipeline_mode = #tpu.pipeline_mode<synchronous>, transform_indices = @transform_2, window_bounds = array<i64: 1, 256>}, {pipeline_mode = #tpu.pipeline_mode<synchronous>, transform_indices = @transform_3, window_bounds = array<i64: 256, 256>}, {pipeline_mode = #tpu.pipeline_mode<synchronous>, transform_indices = @transform_4, window_bounds = array<i64: 1, 256>}, {pipeline_mode = #tpu.pipeline_mode<synchronous>, transform_indices = @transform_5, window_bounds = array<i64: 1, 256>}, {pipeline_mode = #tpu.pipeline_mode<synchronous>, transform_indices = @transform_6, window_bounds = array<i64: 1, 1>}, {transform_indices = @transform_7, window_bounds = array<i64: 64, 1>}]} {
    %c0 = arith.constant 0 : index
    %c0_0 = arith.constant 0 : index
    %0 = vector.load %arg1[%c0, %c0_0] : memref<64x32xf32, #tpu.memory_space<vmem>>, vector<64x32xf32>
    %1 = arith.truncf %0 : vector<64x32xf32> to vector<64x32xbf16>
    %c0_1 = arith.constant 0 : index
    %c0_2 = arith.constant 0 : index
    %2 = vector.load %arg2[%c0_1, %c0_2] : memref<32x256xbf16, #tpu.memory_space<vmem>>, vector<32x256xbf16>
    %cst = arith.constant dense<0.000000e+00> : vector<64x256xf32>
    %3 = tpu.matmul %1, %2, %cst {dimension_numbers = #tpu.dot_dimension_numbers<[1], [0], [0], [1], [0, 0, 1, 1], [], []>} : vector<64x32xbf16>, vector<32x256xbf16>, vector<64x256xf32> -> vector<64x256xf32>
    %c0_3 = arith.constant 0 : index
    %c0_4 = arith.constant 0 : index
    %4 = vector.load %arg3[%c0_3, %c0_4] : memref<1x256xf32, #tpu.memory_space<vmem>>, vector<1x256xf32>
    %5 = vector.broadcast %4 : vector<1x256xf32> to vector<64x256xf32>
    %6 = arith.addf %3, %5 : vector<64x256xf32>
    %cst_5 = arith.constant 0.000000e+00 : f32
    %7 = vector.broadcast %cst_5 : f32 to vector<64x256xf32>
    %8 = arith.maximumf %6, %7 : vector<64x256xf32>
    %9 = arith.truncf %8 : vector<64x256xf32> to vector<64x256xbf16>
    %c0_6 = arith.constant 0 : index
    %c0_7 = arith.constant 0 : index
    %10 = vector.load %arg4[%c0_6, %c0_7] : memref<256x256xbf16, #tpu.memory_space<vmem>>, vector<256x256xbf16>
    %cst_8 = arith.constant dense<0.000000e+00> : vector<64x256xf32>
    %11 = tpu.matmul %9, %10, %cst_8 {dimension_numbers = #tpu.dot_dimension_numbers<[1], [0], [0], [1], [0, 0, 1, 1], [], []>} : vector<64x256xbf16>, vector<256x256xbf16>, vector<64x256xf32> -> vector<64x256xf32>
    %c0_9 = arith.constant 0 : index
    %c0_10 = arith.constant 0 : index
    %12 = vector.load %arg5[%c0_9, %c0_10] : memref<1x256xf32, #tpu.memory_space<vmem>>, vector<1x256xf32>
    %13 = vector.broadcast %12 : vector<1x256xf32> to vector<64x256xf32>
    %14 = arith.addf %11, %13 : vector<64x256xf32>
    %cst_11 = arith.constant 0.000000e+00 : f32
    %15 = vector.broadcast %cst_11 : f32 to vector<64x256xf32>
    %16 = arith.maximumf %14, %15 : vector<64x256xf32>
    %c0_12 = arith.constant 0 : index
    %c0_13 = arith.constant 0 : index
    %17 = vector.load %arg6[%c0_12, %c0_13] : memref<1x256xf32, #tpu.memory_space<vmem>>, vector<1x256xf32>
    %18 = vector.broadcast %17 : vector<1x256xf32> to vector<64x256xf32>
    %19 = arith.mulf %16, %18 : vector<64x256xf32>
    %cst_14 = arith.constant dense<0.000000e+00> : vector<64xf32>
    %20 = vector.multi_reduction <add>, %19, %cst_14 [1] : vector<64x256xf32> to vector<64xf32>
    %21 = vector.shape_cast %20 : vector<64xf32> to vector<64x1xf32>
    %c0_15 = arith.constant 0 : index
    %c0_16 = arith.constant 0 : index
    %22 = vector.load %arg7[%c0_15, %c0_16] : memref<1x1xf32, #tpu.memory_space<vmem>>, vector<1x1xf32>
    %23 = vector.broadcast %22 : vector<1x1xf32> to vector<64x1xf32>
    %24 = arith.addf %21, %23 : vector<64x1xf32>
    %c0_17 = arith.constant 0 : index
    %c0_18 = arith.constant 0 : index
    %25 = vector.load %arg8[%c0_17, %c0_18] : memref<64x1xf32, #tpu.memory_space<vmem>>, vector<64x1xf32>
    tpu.vector_store %arg8[%c0_17, %c0_18], %24 {strides = array<i32>} : memref<64x1xf32, #tpu.memory_space<vmem>>, vector<64x1xf32>,
    return
  }
  func.func @transform_0(%arg0: i32) -> (i32, i32) {
    %c0_i32 = arith.constant 0 : i32
    %c0_i32_0 = arith.constant 0 : i32
    return %arg0, %c0_i32 : i32, i32
  }
  func.func @transform_1(%arg0: i32) -> (i32, i32) {
    %c0_i32 = arith.constant 0 : i32
    %c0_i32_0 = arith.constant 0 : i32
    %c0_i32_1 = arith.constant 0 : i32
    return %c0_i32, %c0_i32_0 : i32, i32
  }
  func.func @transform_2(%arg0: i32) -> (i32, i32) {
    %c0_i32 = arith.constant 0 : i32
    %c0_i32_0 = arith.constant 0 : i32
    %c0_i32_1 = arith.constant 0 : i32
    return %c0_i32, %c0_i32_0 : i32, i32
  }
  func.func @transform_3(%arg0: i32) -> (i32, i32) {
    %c0_i32 = arith.constant 0 : i32
    %c0_i32_0 = arith.constant 0 : i32
    %c0_i32_1 = arith.constant 0 : i32
    return %c0_i32, %c0_i32_0 : i32, i32
  }
  func.func @transform_4(%arg0: i32) -> (i32, i32) {
    %c0_i32 = arith.constant 0 : i32
    %c0_i32_0 = arith.constant 0 : i32
    %c0_i32_1 = arith.constant 0 : i32
    return %c0_i32, %c0_i32_0 : i32, i32
  }
  func.func @transform_5(%arg0: i32) -> (i32, i32) {
    %c0_i32 = arith.constant 0 : i32
    %c0_i32_0 = arith.constant 0 : i32
    %c0_i32_1 = arith.constant 0 : i32
    return %c0_i32, %c0_i32_0 : i32, i32
  }
  func.func @transform_6(%arg0: i32) -> (i32, i32) {
    %c0_i32 = arith.constant 0 : i32
    %c0_i32_0 = arith.constant 0 : i32
    %c0_i32_1 = arith.constant 0 : i32
    return %c0_i32, %c0_i32_0 : i32, i32
  }
  func.func @transform_7(%arg0: i32) -> (i32, i32) {
    %c0_i32 = arith.constant 0 : i32
    %c0_i32_0 = arith.constant 0 : i32
    return %arg0, %c0_i32 : i32, i32
  }
}

</mosaic_0001>

<llo_original>
// kernel: tpu_custom_call.1
$region0: #{tpu_custom_call.1}
  #allocation0 [shape = 'u32[]', space=smem, size = 0x4, offset = 0x4, fixed_abs, tag = 'smem constant byte address 0x4 - core index']
  #allocation1 [shape = 'u32[144,128]{1,0:T(1,128)}', space=vmem, size = 0x12000, scoped, tag = 'internal scratch']
  #allocation2 [shape = 'f32[1,1]{1,0:T(1,128)S(1)}', space=vmem, size = 0x200, scoped, tag = 'scoped memory for tpu_custom_call.1']
  %s0 = inlined_call_operand.vmem [shape: f32[64,32], index: 0, kind: input, shape index: {}]
  %s1 = inlined_call_operand.vmem [shape: bf16[32,256], index: 1, kind: input, shape index: {}]
  %s2 = inlined_call_operand.vmem [shape: f32[1,256], index: 2, kind: input, shape index: {}]
  %s3 = inlined_call_operand.hbm [shape: bf16[256,256], index: 3, kind: input, shape index: {}]
  %s4 = inlined_call_operand.vmem [shape: f32[1,256], index: 4, kind: input, shape index: {}]
  %s5 = inlined_call_operand.vmem [shape: f32[1,256], index: 5, kind: input, shape index: {}]
  %s6 = inlined_call_operand.<no memory space> [shape: f32[1,1], index: 6, kind: input, shape index: {}]
  %s7 = inlined_call_operand.hbm [shape: f32[1,64], index: 7, kind: output, shape index: {}]
  %s8 = sld [smem:[#allocation0]]
  $region42: #{tpu_custom_call.1} parent=0
    _
  %s10 = ssub.s32 1, %s8
  %s11 = scalar_select 0, %s10, %s8
  %v12 = vstv %s6
  %13 = vst [vmem:[#allocation2] sm:$0x1] %v12
  $region1: #{tpu_custom_call.1} parent=0
    #allocation3 [shape = 'u8[131072]{0}', space=vmem, size = 0x20000, scoped, tag = 'input window, operand 3, single buffered']
    #allocation4 [shape = 's32[1]{0}', space=sflag, size = 0x4, scoped, tag = 'scoped memory for tpu_custom_call.1']
    #allocation5 [shape = 's32[1]{0}', space=sflag, size = 0x4, scoped, tag = 'scoped memory for tpu_custom_call.1']
    #allocation6 [shape = 'u8[512]{0}', space=vmem, size = 0x400, scoped, tag = 'output window, operand 0, single buffered']
    %14 = vsyncpa [#allocation4], 0
    %15 = vsyncpa [#allocation5], 0
    // Predicated region
    $region2: #{tpu_custom_call.1} parent=1 // pred_check
      _
    $region3: #{tpu_custom_call.1} parent=1 // pred_check_branch
      %17 = sbr.rel (0) target = $region5
    $region4: #{tpu_custom_call.1} parent=1 // pred_region
      _
    $region5: #{tpu_custom_call.1} parent=1 // pred_fallthru
      _
    // Predicated region
    $region6: #{tpu_custom_call.1} parent=1 // pred_check
      _
    $region7: #{tpu_custom_call.1} parent=1 // pred_check_branch
      %19 = sbr.rel (0) target = $region9
    $region8: #{tpu_custom_call.1} parent=1 // pred_region
      _
    $region9: #{tpu_custom_call.1} parent=1 // pred_fallthru
      _
    // Predicated region
    $region10: #{tpu_custom_call.1} parent=1 // pred_check
      _
    $region11: #{tpu_custom_call.1} parent=1 // pred_check_branch
      %21 = sbr.rel (0) target = $region13
    $region12: #{tpu_custom_call.1} parent=1 // pred_region
      _
    $region13: #{tpu_custom_call.1} parent=1 // pred_fallthru
      _
    // Predicated region
    $region14: #{tpu_custom_call.1} parent=1 // pred_check
      _
    $region15: #{tpu_custom_call.1} parent=1 // pred_check_branch
      %23 = sbr.rel (0) target = $region17
    $region16: #{tpu_custom_call.1} parent=1 // pred_region
      %s25 = ssub.s32 4096, 4096
      %26 = vsyncadd [#allocation4], %s25
      %s27 = sshll.u32 [#allocation3], 4
      %s28 = int_to_ptr.vmem [resolvable:$true] %s27
      %33 = dma.hbm_to_vmem [thread:$0]  %s3, 4096, %s28, [#allocation4], 128, 128, 8
    $region17: #{tpu_custom_call.1} parent=1 // pred_fallthru
      _
    // Predicated region
    $region18: #{tpu_custom_call.1} parent=1 // pred_check
      _
    $region19: #{tpu_custom_call.1} parent=1 // pred_check_branch
      %35 = sbr.rel (0) target = $region21
    $region20: #{tpu_custom_call.1} parent=1 // pred_region
      _
    $region21: #{tpu_custom_call.1} parent=1 // pred_fallthru
      _
    // Predicated region
    $region22: #{tpu_custom_call.1} parent=1 // pred_check
      _
    $region23: #{tpu_custom_call.1} parent=1 // pred_check_branch
      %37 = sbr.rel (0) target = $region25
    $region24: #{tpu_custom_call.1} parent=1 // pred_region
      _
    $region25: #{tpu_custom_call.1} parent=1 // pred_fallthru
      _
    // Predicated region
    $region26: #{tpu_custom_call.1} parent=1 // pred_check
      _
    $region27: #{tpu_custom_call.1} parent=1 // pred_check_branch
      %39 = sbr.rel (0) target = $region29
    $region28: #{tpu_custom_call.1} parent=1 // pred_region
      _
    $region29: #{tpu_custom_call.1} parent=1 // pred_fallthru
      _
    // Predicated region
    $region30: #{tpu_custom_call.1} parent=1 // pred_check
      _
    $region31: #{tpu_custom_call.1} parent=1 // pred_check_branch
      %41 = sbr.rel (0) target = $region33
    $region32: #{tpu_custom_call.1} parent=1 // pred_region
      %42 = dma.done [#allocation4], 4096
    $region33: #{tpu_custom_call.1} parent=1 // pred_fallthru
      _
    %v44 = vld [vmem:[%s0] sm:$0xff]
    %v45 = vld [vmem:[%s0 + $0x8] sm:$0xff]
    %v46 = vld [vmem:[%s0 + $0x10] sm:$0xff]
    %v47 = vld [vmem:[%s0 + $0x18] sm:$0xff]
    %v48 = vld [vmem:[%s0 + $0x20] sm:$0xff]
    %v49 = vld [vmem:[%s0 + $0x28] sm:$0xff]
    %v50 = vld [vmem:[%s0 + $0x30] sm:$0xff]
    %v51 = vld [vmem:[%s0 + $0x38] sm:$0xff]
    %v52 = vpack.c.bf16 %v45, %v44
    %v53 = vpack.c.bf16 %v47, %v46
    %v54 = vpack.c.bf16 %v49, %v48
    %v55 = vpack.c.bf16 %v51, %v50
    %v56 = vld [vmem:[%s1] sm:$0xff]
    %v57 = vld [vmem:[%s1 + $0x8] sm:$0xff]
    %v58 = vld [vmem:[%s1 + $0x10] sm:$0xff]
    %v59 = vld [vmem:[%s1 + $0x18] sm:$0xff]
    %v60 = vld [vmem:[%s2] sm:$0x3]
    %v62 = vlaneseq
    %v63 = vshrl.u32 %v62, 7
    %v64 = vsub.s32 0, %v63
    %v65 = vrot.slane %v60, %v64
    %v66 = vlaneseq
    %v67 = vshrl.u32 %v66, 7
    %v68 = vsub.s32 1, %v67
    %v69 = vrot.slane %v60, %v68
    %v76 = vunpack.c.l.b16 %v56
    %v77 = vunpack.c.h.b16 %v56
    %v78 = vunpack.c.l.b16 %v57
    %v79 = vunpack.c.h.b16 %v57
    %v80 = vunpack.c.l.b16 %v58
    %v81 = vunpack.c.h.b16 %v58
    %v82 = vunpack.c.l.b16 %v59
    %v83 = vunpack.c.h.b16 %v59
    %v84 = vpack.c.b16 %v78, %v76
    %v85 = vpack.c.b16 %v79, %v77
    %v86 = vpack.c.b16 %v82, %v80
    %v87 = vpack.c.b16 %v83, %v81
    %vm92 = vcmask 261120
    %v94 = vsel %vm92, %v52, 0
    %v97 = vsel %vm92, %v53, 0
    %v100 = vsel %vm92, %v54, 0
    %v103 = vsel %vm92, %v55, 0
    %105 = vmatprep.subr.bf16.mxu0 %v85
    %106 = vmatpush1.bf16.msra.mxu0 %v84
    %107 = vmatprep.subr.bf16.mxu0 %v87
    %108 = vmatpush1.bf16.msra.mxu0 %v86
    %109 = vmatprep.subr.bf16.mxu0 0
    %110 = vmatpush1.bf16.msra.mxu0 0
    %111 = vmatprep.subr.bf16.mxu0 0
    %112 = vmatpush1.bf16.msra.mxu0 0
    %113 = vmatprep.subr.bf16.mxu0 0
    %114 = vmatpush1.bf16.msra.mxu0 0
    %115 = vmatprep.subr.bf16.mxu0 0
    %116 = vmatpush1.bf16.msra.mxu0 0
    %117 = vmatprep.subr.bf16.mxu0 0
    %118 = vmatpush1.bf16.msra.mxu0 0
    %119 = vmatprep.subr.bf16.mxu0 0
    %120 = vmatpush1.bf16.msra.mxu0 0
    %121 = vmatprep.subr.bf16.mxu0 0
    %122 = vmatpush1.bf16.msra.mxu0 0
    %123 = vmatprep.subr.bf16.mxu0 0
    %124 = vmatpush1.bf16.msra.mxu0 0
    %125 = vmatprep.subr.bf16.mxu0 0
    %126 = vmatpush1.bf16.msra.mxu0 0
    %127 = vmatprep.subr.bf16.mxu0 0
    %128 = vmatpush1.bf16.msra.mxu0 0
    %129 = vmatprep.subr.bf16.mxu0 0
    %130 = vmatpush1.bf16.msra.mxu0 0
    %131 = vmatprep.subr.bf16.mxu0 0
    %132 = vmatpush1.bf16.msra.mxu0 0
    %133 = vmatprep.subr.bf16.mxu0 0
    %134 = vmatpush1.bf16.msra.mxu0 0
    %135 = vmatprep.subr.bf16.mxu0 0
    %136 = vmatpush1.bf16.msra.mxu0 0
    %137 = vmatprep.mubr.bf16.mxu0 0
    %138 = vmatmul.mubr.bf16.gmra.mrb[0].mxu0 %v94
    %v139 = vpop.f32.mrb[0].mxu0
    %v140 = vadd.f32 %v65, %v139
    %v141 = vpop.f32.mrb[0].mxu0
    %v142 = vadd.f32 %v69, %v141
    %v143 = vpop.f32.mrb[0].mxu0
    %v144 = vadd.f32 %v65, %v143
    %v145 = vpop.f32.mrb[0].mxu0
    %v146 = vadd.f32 %v69, %v145
    %147 = vmatprep.mubr.bf16.mxu0 0
    %148 = vmatmul.mubr.bf16.gmra.mrb[0].mxu0 %v97
    %v149 = vpop.f32.mrb[0].mxu0
    %v150 = vadd.f32 %v65, %v149
    %v151 = vpop.f32.mrb[0].mxu0
    %v152 = vadd.f32 %v69, %v151
    %v153 = vpop.f32.mrb[0].mxu0
    %v154 = vadd.f32 %v65, %v153
    %v155 = vpop.f32.mrb[0].mxu0
    %v156 = vadd.f32 %v69, %v155
    %157 = vmatprep.mubr.bf16.mxu0 0
    %158 = vmatmul.mubr.bf16.gmra.mrb[0].mxu0 %v100
    %v159 = vpop.f32.mrb[0].mxu0
    %v160 = vadd.f32 %v65, %v159
    %v161 = vpop.f32.mrb[0].mxu0
    %v162 = vadd.f32 %v69, %v161
    %v163 = vpop.f32.mrb[0].mxu0
    %v164 = vadd.f32 %v65, %v163
    %v165 = vpop.f32.mrb[0].mxu0
    %v166 = vadd.f32 %v69, %v165
    %167 = vmatprep.mubr.bf16.mxu0 0
    %168 = vmatmul.mubr.bf16.gmra.mrb[0].mxu0 %v103
    %v169 = vpop.f32.mrb[0].mxu0
    %v170 = vadd.f32 %v65, %v169
    %v171 = vpop.f32.mrb[0].mxu0
    %v172 = vadd.f32 %v69, %v171
    %v173 = vpop.f32.mrb[0].mxu0
    %v174 = vadd.f32 %v65, %v173
    %v175 = vpop.f32.mrb[0].mxu0
    %v176 = vadd.f32 %v69, %v175
    %177 = vdwg.mxu0
    %v178 = vmax.f32 %v140, 0.0
    %v179 = vmax.f32 %v142, 0.0
    %v180 = vmax.f32 %v144, 0.0
    %v181 = vmax.f32 %v146, 0.0
    %v182 = vmax.f32 %v150, 0.0
    %v183 = vmax.f32 %v152, 0.0
    %v184 = vmax.f32 %v154, 0.0
    %v185 = vmax.f32 %v156, 0.0
    %v186 = vmax.f32 %v160, 0.0
    %v187 = vmax.f32 %v162, 0.0
    %v188 = vmax.f32 %v164, 0.0
    %v189 = vmax.f32 %v166, 0.0
    %v190 = vmax.f32 %v170, 0.0
    %v191 = vmax.f32 %v172, 0.0
    %v192 = vmax.f32 %v174, 0.0
    %v193 = vmax.f32 %v176, 0.0
    %v194 = vpack.c.bf16 %v180, %v178
    %v195 = vpack.c.bf16 %v181, %v179
    %v196 = vpack.c.bf16 %v184, %v182
    %v197 = vpack.c.bf16 %v185, %v183
    %v198 = vpack.c.bf16 %v188, %v186
    %v199 = vpack.c.bf16 %v189, %v187
    %v200 = vpack.c.bf16 %v192, %v190
    %v201 = vpack.c.bf16 %v193, %v191
    %v202 = vld [vmem:[#allocation3] sm:$0xff]
    %v203 = vld [vmem:[#allocation3 + $0x8] sm:$0xff]
    %v204 = vld [vmem:[#allocation3 + $0x10] sm:$0xff]
    %v205 = vld [vmem:[#allocation3 + $0x18] sm:$0xff]
    %v206 = vld [vmem:[#allocation3 + $0x20] sm:$0xff]
    %v207 = vld [vmem:[#allocation3 + $0x28] sm:$0xff]
    %v208 = vld [vmem:[#allocation3 + $0x30] sm:$0xff]
    %v209 = vld [vmem:[#allocation3 + $0x38] sm:$0xff]
    %v210 = vld [vmem:[#allocation3 + $0x40] sm:$0xff]
    %v211 = vld [vmem:[#allocation3 + $0x48] sm:$0xff]
    %v212 = vld [vmem:[#allocation3 + $0x50] sm:$0xff]
    %v213 = vld [vmem:[#allocation3 + $0x58] sm:$0xff]
    %v214 = vld [vmem:[#allocation3 + $0x60] sm:$0xff]
    %v215 = vld [vmem:[#allocation3 + $0x68] sm:$0xff]
    %v216 = vld [vmem:[#allocation3 + $0x70] sm:$0xff]
    %v217 = vld [vmem:[#allocation3 + $0x78] sm:$0xff]
    %v218 = vld [vmem:[#allocation3 + $0x80] sm:$0xff]
    %v219 = vld [vmem:[#allocation3 + $0x88] sm:$0xff]
    %v220 = vld [vmem:[#allocation3 + $0x90] sm:$0xff]
    %v221 = vld [vmem:[#allocation3 + $0x98] sm:$0xff]
    %v222 = vld [vmem:[#allocation3 + $0xa0] sm:$0xff]
    %v223 = vld [vmem:[#allocation3 + $0xa8] sm:$0xff]
    %v224 = vld [vmem:[#allocation3 + $0xb0] sm:$0xff]
    %v225 = vld [vmem:[#allocation3 + $0xb8] sm:$0xff]
    %v226 = vld [vmem:[#allocation3 + $0xc0] sm:$0xff]
    %v227 = vld [vmem:[#allocation3 + $0xc8] sm:$0xff]
    %v228 = vld [vmem:[#allocation3 + $0xd0] sm:$0xff]
    %v229 = vld [vmem:[#allocation3 + $0xd8] sm:$0xff]
    %v230 = vld [vmem:[#allocation3 + $0xe0] sm:$0xff]
    %v231 = vld [vmem:[#allocation3 + $0xe8] sm:$0xff]
    %v232 = vld [vmem:[#allocation3 + $0xf0] sm:$0xff]
    %v233 = vld [vmem:[#allocation3 + $0xf8] sm:$0xff]
    %v234 = vld [vmem:[%s4] sm:$0x3]
    %v236 = vlaneseq
    %v237 = vshrl.u32 %v236, 7
    %v238 = vsub.s32 0, %v237
    %v239 = vrot.slane %v234, %v238
    %v240 = vlaneseq
    %v241 = vshrl.u32 %v240, 7
    %v242 = vsub.s32 1, %v241
    %v243 = vrot.slane %v234, %v242
    %v278 = vunpack.c.l.b16 %v202
    %v279 = vunpack.c.h.b16 %v202
    %v280 = vunpack.c.l.b16 %v203
    %v281 = vunpack.c.h.b16 %v203
    %v282 = vunpack.c.l.b16 %v204
    %v283 = vunpack.c.h.b16 %v204
    %v284 = vunpack.c.l.b16 %v205
    %v285 = vunpack.c.h.b16 %v205
    %v286 = vunpack.c.l.b16 %v206
    %v287 = vunpack.c.h.b16 %v206
    %v288 = vunpack.c.l.b16 %v207
    %v289 = vunpack.c.h.b16 %v207
    %v290 = vunpack.c.l.b16 %v208
    %v291 = vunpack.c.h.b16 %v208
    %v292 = vunpack.c.l.b16 %v209
    %v293 = vunpack.c.h.b16 %v209
    %v294 = vunpack.c.l.b16 %v210
    %v295 = vunpack.c.h.b16 %v210
    %v296 = vunpack.c.l.b16 %v211
    %v297 = vunpack.c.h.b16 %v211
    %v298 = vunpack.c.l.b16 %v212
    %v299 = vunpack.c.h.b16 %v212
    %v300 = vunpack.c.l.b16 %v213
    %v301 = vunpack.c.h.b16 %v213
    %v302 = vunpack.c.l.b16 %v214
    %v303 = vunpack.c.h.b16 %v214
    %v304 = vunpack.c.l.b16 %v215
    %v305 = vunpack.c.h.b16 %v215
    %v306 = vunpack.c.l.b16 %v216
    %v307 = vunpack.c.h.b16 %v216
    %v308 = vunpack.c.l.b16 %v217
    %v309 = vunpack.c.h.b16 %v217
    %v310 = vunpack.c.l.b16 %v218
    %v311 = vunpack.c.h.b16 %v218
    %v312 = vunpack.c.l.b16 %v219
    %v313 = vunpack.c.h.b16 %v219
    %v314 = vunpack.c.l.b16 %v220
    %v315 = vunpack.c.h.b16 %v220
    %v316 = vunpack.c.l.b16 %v221
    %v317 = vunpack.c.h.b16 %v221
    %v318 = vunpack.c.l.b16 %v222
    %v319 = vunpack.c.h.b16 %v222
    %v320 = vunpack.c.l.b16 %v223
    %v321 = vunpack.c.h.b16 %v223
    %v322 = vunpack.c.l.b16 %v224
    %v323 = vunpack.c.h.b16 %v224
    %v324 = vunpack.c.l.b16 %v225
    %v325 = vunpack.c.h.b16 %v225
    %v326 = vunpack.c.l.b16 %v226
    %v327 = vunpack.c.h.b16 %v226
    %v328 = vunpack.c.l.b16 %v227
    %v329 = vunpack.c.h.b16 %v227
    %v330 = vunpack.c.l.b16 %v228
    %v331 = vunpack.c.h.b16 %v228
    %v332 = vunpack.c.l.b16 %v229
    %v333 = vunpack.c.h.b16 %v229
    %v334 = vunpack.c.l.b16 %v230
    %v335 = vunpack.c.h.b16 %v230
    %v336 = vunpack.c.l.b16 %v231
    %v337 = vunpack.c.h.b16 %v231
    %v338 = vunpack.c.l.b16 %v232
    %v339 = vunpack.c.h.b16 %v232
    %v340 = vunpack.c.l.b16 %v233
    %v341 = vunpack.c.h.b16 %v233
    %v342 = vpack.c.b16 %v280, %v278
    %v343 = vpack.c.b16 %v281, %v279
    %v344 = vpack.c.b16 %v284, %v282
    %v345 = vpack.c.b16 %v285, %v283
    %v346 = vpack.c.b16 %v288, %v286
    %v347 = vpack.c.b16 %v289, %v287
    %v348 = vpack.c.b16 %v292, %v290
    %v349 = vpack.c.b16 %v293, %v291
    %v350 = vpack.c.b16 %v296, %v294
    %v351 = vpack.c.b16 %v297, %v295
    %v352 = vpack.c.b16 %v300, %v298
    %v353 = vpack.c.b16 %v301, %v299
    %v354 = vpack.c.b16 %v304, %v302
    %v355 = vpack.c.b16 %v305, %v303
    %v356 = vpack.c.b16 %v308, %v306
    %v357 = vpack.c.b16 %v309, %v307
    %v358 = vpack.c.b16 %v312, %v310
    %v359 = vpack.c.b16 %v313, %v311
    %v360 = vpack.c.b16 %v316, %v314
    %v361 = vpack.c.b16 %v317, %v315
    %v362 = vpack.c.b16 %v320, %v318
    %v363 = vpack.c.b16 %v321, %v319
    %v364 = vpack.c.b16 %v324, %v322
    %v365 = vpack.c.b16 %v325, %v323
    %v366 = vpack.c.b16 %v328, %v326
    %v367 = vpack.c.b16 %v329, %v327
    %v368 = vpack.c.b16 %v332, %v330
    %v369 = vpack.c.b16 %v333, %v331
    %v370 = vpack.c.b16 %v336, %v334
    %v371 = vpack.c.b16 %v337, %v335
    %v372 = vpack.c.b16 %v340, %v338
    %v373 = vpack.c.b16 %v341, %v339
    %406 = vmatprep.subr.bf16.mxu0 %v343
    %407 = vmatpush1.bf16.msra.mxu0 %v342
    %408 = vmatprep.subr.bf16.mxu0 %v345
    %409 = vmatpush1.bf16.msra.mxu0 %v344
    %410 = vmatprep.subr.bf16.mxu0 %v347
    %411 = vmatpush1.bf16.msra.mxu0 %v346
    %412 = vmatprep.subr.bf16.mxu0 %v349
    %413 = vmatpush1.bf16.msra.mxu0 %v348
    %414 = vmatprep.subr.bf16.mxu0 %v351
    %415 = vmatpush1.bf16.msra.mxu0 %v350
    %416 = vmatprep.subr.bf16.mxu0 %v353
    %417 = vmatpush1.bf16.msra.mxu0 %v352
    %418 = vmatprep.subr.bf16.mxu0 %v355
    %419 = vmatpush1.bf16.msra.mxu0 %v354
    %420 = vmatprep.subr.bf16.mxu0 %v357
    %421 = vmatpush1.bf16.msra.mxu0 %v356
    %422 = vmatprep.subr.bf16.mxu0 %v359
    %423 = vmatpush1.bf16.msra.mxu0 %v358
    %424 = vmatprep.subr.bf16.mxu0 %v361
    %425 = vmatpush1.bf16.msra.mxu0 %v360
    %426 = vmatprep.subr.bf16.mxu0 %v363
    %427 = vmatpush1.bf16.msra.mxu0 %v362
    %428 = vmatprep.subr.bf16.mxu0 %v365
    %429 = vmatpush1.bf16.msra.mxu0 %v364
    %430 = vmatprep.subr.bf16.mxu0 %v367
    %431 = vmatpush1.bf16.msra.mxu0 %v366
    %432 = vmatprep.subr.bf16.mxu0 %v369
    %433 = vmatpush1.bf16.msra.mxu0 %v368
    %434 = vmatprep.subr.bf16.mxu0 %v371
    %435 = vmatpush1.bf16.msra.mxu0 %v370
    %436 = vmatprep.subr.bf16.mxu0 %v373
    %437 = vmatpush1.bf16.msra.mxu0 %v372
    %438 = vmatprep.mubr.bf16.mxu0 %v195
    %439 = vmatmul.mubr.bf16.gmra.mrb[0].mxu0 %v194
    %v440 = vpop.f32.mrb[0].mxu0
    %v441 = vadd.f32 %v239, %v440
    %v442 = vpop.f32.mrb[0].mxu0
    %v443 = vadd.f32 %v243, %v442
    %v444 = vpop.f32.mrb[0].mxu0
    %v445 = vadd.f32 %v239, %v444
    %v446 = vpop.f32.mrb[0].mxu0
    %v447 = vadd.f32 %v243, %v446
    %448 = vmatprep.mubr.bf16.mxu0 %v197
    %449 = vmatmul.mubr.bf16.gmra.mrb[0].mxu0 %v196
    %v450 = vpop.f32.mrb[0].mxu0
    %v451 = vadd.f32 %v239, %v450
    %v452 = vpop.f32.mrb[0].mxu0
    %v453 = vadd.f32 %v243, %v452
    %v454 = vpop.f32.mrb[0].mxu0
    %v455 = vadd.f32 %v239, %v454
    %v456 = vpop.f32.mrb[0].mxu0
    %v457 = vadd.f32 %v243, %v456
    %458 = vmatprep.mubr.bf16.mxu0 %v199
    %459 = vmatmul.mubr.bf16.gmra.mrb[0].mxu0 %v198
    %v460 = vpop.f32.mrb[0].mxu0
    %v461 = vadd.f32 %v239, %v460
    %v462 = vpop.f32.mrb[0].mxu0
    %v463 = vadd.f32 %v243, %v462
    %v464 = vpop.f32.mrb[0].mxu0
    %v465 = vadd.f32 %v239, %v464
    %v466 = vpop.f32.mrb[0].mxu0
    %v467 = vadd.f32 %v243, %v466
    %468 = vmatprep.mubr.bf16.mxu0 %v201
    %469 = vmatmul.mubr.bf16.gmra.mrb[0].mxu0 %v200
    %v470 = vpop.f32.mrb[0].mxu0
    %v471 = vadd.f32 %v239, %v470
    %v472 = vpop.f32.mrb[0].mxu0
    %v473 = vadd.f32 %v243, %v472
    %v474 = vpop.f32.mrb[0].mxu0
    %v475 = vadd.f32 %v239, %v474
    %v476 = vpop.f32.mrb[0].mxu0
    %v477 = vadd.f32 %v243, %v476
    %478 = vdwg.mxu0
    %v479 = vmax.f32 %v441, 0.0
    %v480 = vmax.f32 %v443, 0.0
    %v481 = vmax.f32 %v445, 0.0
    %v482 = vmax.f32 %v447, 0.0
    %v483 = vmax.f32 %v451, 0.0
    %v484 = vmax.f32 %v453, 0.0
    %v485 = vmax.f32 %v455, 0.0
    %v486 = vmax.f32 %v457, 0.0
    %v487 = vmax.f32 %v461, 0.0
    %v488 = vmax.f32 %v463, 0.0
    %v489 = vmax.f32 %v465, 0.0
    %v490 = vmax.f32 %v467, 0.0
    %v491 = vmax.f32 %v471, 0.0
    %v492 = vmax.f32 %v473, 0.0
    %v493 = vmax.f32 %v475, 0.0
    %v494 = vmax.f32 %v477, 0.0
    %v495 = vld [vmem:[%s5] sm:$0x3]
    %v497 = vlaneseq
    %v498 = vshrl.u32 %v497, 7
    %v499 = vsub.s32 0, %v498
    %v500 = vrot.slane %v495, %v499
    %v501 = vlaneseq
    %v502 = vshrl.u32 %v501, 7
    %v503 = vsub.s32 1, %v502
    %v504 = vrot.slane %v495, %v503
    %v507 = vmul.f32 %v479, %v500
    %v508 = vmul.f32 %v480, %v504
    %v509 = vmul.f32 %v481, %v500
    %v510 = vmul.f32 %v482, %v504
    %v511 = vmul.f32 %v483, %v500
    %v512 = vmul.f32 %v484, %v504
    %v513 = vmul.f32 %v485, %v500
    %v514 = vmul.f32 %v486, %v504
    %v515 = vmul.f32 %v487, %v500
    %v516 = vmul.f32 %v488, %v504
    %v517 = vmul.f32 %v489, %v500
    %v518 = vmul.f32 %v490, %v504
    %v519 = vmul.f32 %v491, %v500
    %v520 = vmul.f32 %v492, %v504
    %v521 = vmul.f32 %v493, %v500
    %v522 = vmul.f32 %v494, %v504
    %v523 = vadd.f32 %v507, %v508
    %524 = vadd.xlane.f32.xlu0 %v523
    %v525 = vpop.xlane.xlu0 %524
    %v526 = vadd.f32 %v509, %v510
    %527 = vadd.xlane.f32.xlu0 %v526
    %v528 = vpop.xlane.xlu0 %527
    %v529 = vadd.f32 %v511, %v512
    %530 = vadd.xlane.f32.xlu0 %v529
    %v531 = vpop.xlane.xlu0 %530
    %v532 = vadd.f32 %v513, %v514
    %533 = vadd.xlane.f32.xlu0 %v532
    %v534 = vpop.xlane.xlu0 %533
    %v535 = vadd.f32 %v515, %v516
    %536 = vadd.xlane.f32.xlu0 %v535
    %v537 = vpop.xlane.xlu0 %536
    %v538 = vadd.f32 %v517, %v518
    %539 = vadd.xlane.f32.xlu0 %v538
    %v540 = vpop.xlane.xlu0 %539
    %v541 = vadd.f32 %v519, %v520
    %542 = vadd.xlane.f32.xlu0 %v541
    %v543 = vpop.xlane.xlu0 %542
    %v544 = vadd.f32 %v521, %v522
    %545 = vadd.xlane.f32.xlu0 %v544
    %v546 = vpop.xlane.xlu0 %545
    %547 = vxpose.xlu0.b32.start [1/16] %v525, 128
    %548 = vxpose.xlu0.b32.cont [2/16] %v528, 128
    %549 = vxpose.xlu0.b32.cont [3/16] %v531, 128
    %550 = vxpose.xlu0.b32.cont [4/16] %v534, 128
    %551 = vxpose.xlu0.b32.cont [5/16] %v537, 128
    %552 = vxpose.xlu0.b32.cont [6/16] %v540, 128
    %553 = vxpose.xlu0.b32.cont [7/16] %v543, 128
    %554 = vxpose.xlu0.b32.cont [8/16] %v546, 128
    %555 = vxpose.xlu0.b32.cont [9/16] 0.0, 128
    %556 = vxpose.xlu0.b32.cont [10/16] 0.0, 128
    %557 = vxpose.xlu0.b32.cont [11/16] 0.0, 128
    %558 = vxpose.xlu0.b32.cont [12/16] 0.0, 128
    %559 = vxpose.xlu0.b32.cont [13/16] 0.0, 128
    %560 = vxpose.xlu0.b32.cont [14/16] 0.0, 128
    %561 = vxpose.xlu0.b32.cont [15/16] 0.0, 128
    %562 = vxpose.xlu0.b32.end [16/16] 0.0, 128
    %v563 = vpop.trf.xlu0
    %v564 = vpop.trf.xlu0
    %v565 = vpop.trf.xlu0
    %v566 = vpop.trf.xlu0
    %v567 = vpop.trf.xlu0
    %v568 = vpop.trf.xlu0
    %v569 = vpop.trf.xlu0
    %v570 = vpop.trf.xlu0
    %v571 = vpop.trf.xlu0
    %v572 = vpop.trf.xlu0
    %v573 = vpop.trf.xlu0
    %v574 = vpop.trf.xlu0
    %v575 = vpop.trf.xlu0
    %v576 = vpop.trf.xlu0
    %v577 = vpop.trf.xlu0
    %v578 = vpop.trf.xlu0
    %v579 = vld [vmem:[#allocation2] sm:$0x1]
    %581 = vset.pattern.permute.xlu0 0
    %582 = vperm.xlu0 %581, %v579
    %v583 = vpop.permute.xlu0 %582
    %v585 = vlaneseq
    %v586 = vshrl.u32 %v585, 7
    %v587 = vsub.s32 0, %v586
    %v588 = vrot.slane %v583, %v587
    %v589 = vadd.f32 %v563, %v588
    %vm590 = vcmask 516096
    %591 = vst.msk [vmem:[#allocation6] sm:$0x1] %vm590, %v589
    // Predicated region
    $region34: #{tpu_custom_call.1} parent=1 // pred_check
      _
    $region35: #{tpu_custom_call.1} parent=1 // pred_check_branch
      %593 = sbr.rel (0) target = $region37
    $region36: #{tpu_custom_call.1} parent=1 // pred_region
      %s595 = ssub.s32 16, 16
      %596 = vsyncadd [#allocation5], %s595
      %s598 = sshll.u32 [#allocation6], 4
      %s599 = int_to_ptr.vmem [resolvable:$true] %s598
      %601 = dma.vmem_to_hbm [thread:$0]  %s599, 16, %s7, [#allocation5]
    $region37: #{tpu_custom_call.1} parent=1 // pred_fallthru
      _
    // Predicated region
    $region38: #{tpu_custom_call.1} parent=1 // pred_check
      _
    $region39: #{tpu_custom_call.1} parent=1 // pred_check_branch
      %603 = sbr.rel (0) target = $region41
    $region40: #{tpu_custom_call.1} parent=1 // pred_region
      %604 = dma.done [#allocation5], 16
    $region41: #{tpu_custom_call.1} parent=1 // pred_fallthru
      _
    %605 = vsyncpa [#allocation4], 1
    %606 = vsyncpa [#allocation5], 1

// kernel: tpu_custom_call.1
$region0: #{tpu_custom_call.1}
  #allocation0 [shape = 'u32[]', space=smem, size = 0x4, offset = 0x4, fixed_abs, tag = 'smem constant byte address 0x4 - core index']
  #allocation1 [shape = 'u32[144,128]{1,0:T(1,128)}', space=vmem, size = 0x12000, scoped, tag = 'internal scratch']
  #allocation2 [shape = 'f32[1,1]{1,0:T(1,128)S(1)}', space=vmem, size = 0x200, scoped, tag = 'scoped memory for tpu_custom_call.1']
  %s0 = inlined_call_operand.vmem [shape: f32[64,32], index: 0, kind: input, shape index: {}]
  %s1 = inlined_call_operand.vmem [shape: bf16[32,256], index: 1, kind: input, shape index: {}]
  %s2 = inlined_call_operand.vmem [shape: f32[1,256], index: 2, kind: input, shape index: {}]
  %s3 = inlined_call_operand.hbm [shape: bf16[256,256], index: 3, kind: input, shape index: {}]
  %s4 = inlined_call_operand.vmem [shape: f32[1,256], index: 4, kind: input, shape index: {}]
  %s5 = inlined_call_operand.vmem [shape: f32[1,256], index: 5, kind: input, shape index: {}]
  %s6 = inlined_call_operand.<no memory space> [shape: f32[1,1], index: 6, kind: input, shape index: {}]
  %s7 = inlined_call_operand.vmem [shape: f32[64,1], index: 7, kind: output, shape index: {}]
  %s8 = sld [smem:[#allocation0]]
  $region42: #{tpu_custom_call.1} parent=0
    _
  %s10 = ssub.s32 1, %s8
  %s11 = scalar_select 0, %s10, %s8
  %v12 = vstv %s6
  %13 = vst [vmem:[#allocation2] sm:$0x1] %v12
  $region1: #{tpu_custom_call.1} parent=0
    #allocation3 [shape = 'u8[131072]{0}', space=vmem, size = 0x20000, scoped, tag = 'input window, operand 3, single buffered']
    #allocation4 [shape = 's32[1]{0}', space=sflag, size = 0x4, scoped, tag = 'scoped memory for tpu_custom_call.1']
    %14 = vsyncpa [#allocation4], 0
    // Predicated region
    $region2: #{tpu_custom_call.1} parent=1 // pred_check
      _
    $region3: #{tpu_custom_call.1} parent=1 // pred_check_branch
      %16 = sbr.rel (0) target = $region5
    $region4: #{tpu_custom_call.1} parent=1 // pred_region
      _
    $region5: #{tpu_custom_call.1} parent=1 // pred_fallthru
      _
    // Predicated region
    $region6: #{tpu_custom_call.1} parent=1 // pred_check
      _
    $region7: #{tpu_custom_call.1} parent=1 // pred_check_branch
      %18 = sbr.rel (0) target = $region9
    $region8: #{tpu_custom_call.1} parent=1 // pred_region
      _
    $region9: #{tpu_custom_call.1} parent=1 // pred_fallthru
      _
    // Predicated region
    $region10: #{tpu_custom_call.1} parent=1 // pred_check
      _
    $region11: #{tpu_custom_call.1} parent=1 // pred_check_branch
      %20 = sbr.rel (0) target = $region13
    $region12: #{tpu_custom_call.1} parent=1 // pred_region
      _
    $region13: #{tpu_custom_call.1} parent=1 // pred_fallthru
      _
    // Predicated region
    $region14: #{tpu_custom_call.1} parent=1 // pred_check
      _
    $region15: #{tpu_custom_call.1} parent=1 // pred_check_branch
      %22 = sbr.rel (0) target = $region17
    $region16: #{tpu_custom_call.1} parent=1 // pred_region
      %s24 = ssub.s32 4096, 4096
      %25 = vsyncadd [#allocation4], %s24
      %s26 = sshll.u32 [#allocation3], 4
      %s27 = int_to_ptr.vmem [resolvable:$true] %s26
      %32 = dma.hbm_to_vmem [thread:$0]  %s3, 4096, %s27, [#allocation4], 128, 128, 8
    $region17: #{tpu_custom_call.1} parent=1 // pred_fallthru
      _
    // Predicated region
    $region18: #{tpu_custom_call.1} parent=1 // pred_check
      _
    $region19: #{tpu_custom_call.1} parent=1 // pred_check_branch
      %34 = sbr.rel (0) target = $region21
    $region20: #{tpu_custom_call.1} parent=1 // pred_region
      _
    $region21: #{tpu_custom_call.1} parent=1 // pred_fallthru
      _
    // Predicated region
    $region22: #{tpu_custom_call.1} parent=1 // pred_check
      _
    $region23: #{tpu_custom_call.1} parent=1 // pred_check_branch
      %36 = sbr.rel (0) target = $region25
    $region24: #{tpu_custom_call.1} parent=1 // pred_region
      _
    $region25: #{tpu_custom_call.1} parent=1 // pred_fallthru
      _
    // Predicated region
    $region26: #{tpu_custom_call.1} parent=1 // pred_check
      _
    $region27: #{tpu_custom_call.1} parent=1 // pred_check_branch
      %38 = sbr.rel (0) target = $region29
    $region28: #{tpu_custom_call.1} parent=1 // pred_region
      _
    $region29: #{tpu_custom_call.1} parent=1 // pred_fallthru
      _
    // Predicated region
    $region30: #{tpu_custom_call.1} parent=1 // pred_check
      _
    $region31: #{tpu_custom_call.1} parent=1 // pred_check_branch
      %40 = sbr.rel (0) target = $region33
    $region32: #{tpu_custom_call.1} parent=1 // pred_region
      %41 = dma.done [#allocation4], 4096
    $region33: #{tpu_custom_call.1} parent=1 // pred_fallthru
      _
    %v43 = vld [vmem:[%s0] sm:$0xff]
    %v44 = vld [vmem:[%s0 + $0x8] sm:$0xff]
    %v45 = vld [vmem:[%s0 + $0x10] sm:$0xff]
    %v46 = vld [vmem:[%s0 + $0x18] sm:$0xff]
    %v47 = vld [vmem:[%s0 + $0x20] sm:$0xff]
    %v48 = vld [vmem:[%s0 + $0x28] sm:$0xff]
    %v49 = vld [vmem:[%s0 + $0x30] sm:$0xff]
    %v50 = vld [vmem:[%s0 + $0x38] sm:$0xff]
    %v51 = vpack.c.bf16 %v44, %v43
    %v52 = vpack.c.bf16 %v46, %v45
    %v53 = vpack.c.bf16 %v48, %v47
    %v54 = vpack.c.bf16 %v50, %v49
    %v55 = vld [vmem:[%s1] sm:$0xff]
    %v56 = vld [vmem:[%s1 + $0x8] sm:$0xff]
    %v57 = vld [vmem:[%s1 + $0x10] sm:$0xff]
    %v58 = vld [vmem:[%s1 + $0x18] sm:$0xff]
    %v59 = vld [vmem:[%s2] sm:$0x3]
    %v61 = vlaneseq
    %v62 = vshrl.u32 %v61, 7
    %v63 = vsub.s32 0, %v62
    %v64 = vrot.slane %v59, %v63
    %v65 = vlaneseq
    %v66 = vshrl.u32 %v65, 7
    %v67 = vsub.s32 1, %v66
    %v68 = vrot.slane %v59, %v67
    %v75 = vunpack.c.l.b16 %v55
    %v76 = vunpack.c.h.b16 %v55
    %v77 = vunpack.c.l.b16 %v56
    %v78 = vunpack.c.h.b16 %v56
    %v79 = vunpack.c.l.b16 %v57
    %v80 = vunpack.c.h.b16 %v57
    %v81 = vunpack.c.l.b16 %v58
    %v82 = vunpack.c.h.b16 %v58
    %v83 = vpack.c.b16 %v77, %v75
    %v84 = vpack.c.b16 %v78, %v76
    %v85 = vpack.c.b16 %v81, %v79
    %v86 = vpack.c.b16 %v82, %v80
    %vm91 = vcmask 261120
    %v93 = vsel %vm91, %v51, 0
    %v96 = vsel %vm91, %v52, 0
    %v99 = vsel %vm91, %v53, 0
    %v102 = vsel %vm91, %v54, 0
    %104 = vmatprep.subr.bf16.mxu0 %v84
    %105 = vmatpush1.bf16.msra.mxu0 %v83
    %106 = vmatprep.subr.bf16.mxu0 %v86
    %107 = vmatpush1.bf16.msra.mxu0 %v85
    %108 = vmatprep.subr.bf16.mxu0 0
    %109 = vmatpush1.bf16.msra.mxu0 0
    %110 = vmatprep.subr.bf16.mxu0 0
    %111 = vmatpush1.bf16.msra.mxu0 0
    %112 = vmatprep.subr.bf16.mxu0 0
    %113 = vmatpush1.bf16.msra.mxu0 0
    %114 = vmatprep.subr.bf16.mxu0 0
    %115 = vmatpush1.bf16.msra.mxu0 0
    %116 = vmatprep.subr.bf16.mxu0 0
    %117 = vmatpush1.bf16.msra.mxu0 0
    %118 = vmatprep.subr.bf16.mxu0 0
    %119 = vmatpush1.bf16.msra.mxu0 0
    %120 = vmatprep.subr.bf16.mxu0 0
    %121 = vmatpush1.bf16.msra.mxu0 0
    %122 = vmatprep.subr.bf16.mxu0 0
    %123 = vmatpush1.bf16.msra.mxu0 0
    %124 = vmatprep.subr.bf16.mxu0 0
    %125 = vmatpush1.bf16.msra.mxu0 0
    %126 = vmatprep.subr.bf16.mxu0 0
    %127 = vmatpush1.bf16.msra.mxu0 0
    %128 = vmatprep.subr.bf16.mxu0 0
    %129 = vmatpush1.bf16.msra.mxu0 0
    %130 = vmatprep.subr.bf16.mxu0 0
    %131 = vmatpush1.bf16.msra.mxu0 0
    %132 = vmatprep.subr.bf16.mxu0 0
    %133 = vmatpush1.bf16.msra.mxu0 0
    %134 = vmatprep.subr.bf16.mxu0 0
    %135 = vmatpush1.bf16.msra.mxu0 0
    %136 = vmatprep.mubr.bf16.mxu0 0
    %137 = vmatmul.mubr.bf16.gmra.mrb[0].mxu0 %v93
    %v138 = vpop.f32.mrb[0].mxu0
    %v139 = vadd.f32 %v64, %v138
    %v140 = vpop.f32.mrb[0].mxu0
    %v141 = vadd.f32 %v68, %v140
    %v142 = vpop.f32.mrb[0].mxu0
    %v143 = vadd.f32 %v64, %v142
    %v144 = vpop.f32.mrb[0].mxu0
    %v145 = vadd.f32 %v68, %v144
    %146 = vmatprep.mubr.bf16.mxu0 0
    %147 = vmatmul.mubr.bf16.gmra.mrb[0].mxu0 %v96
    %v148 = vpop.f32.mrb[0].mxu0
    %v149 = vadd.f32 %v64, %v148
    %v150 = vpop.f32.mrb[0].mxu0
    %v151 = vadd.f32 %v68, %v150
    %v152 = vpop.f32.mrb[0].mxu0
    %v153 = vadd.f32 %v64, %v152
    %v154 = vpop.f32.mrb[0].mxu0
    %v155 = vadd.f32 %v68, %v154
    %156 = vmatprep.mubr.bf16.mxu0 0
    %157 = vmatmul.mubr.bf16.gmra.mrb[0].mxu0 %v99
    %v158 = vpop.f32.mrb[0].mxu0
    %v159 = vadd.f32 %v64, %v158
    %v160 = vpop.f32.mrb[0].mxu0
    %v161 = vadd.f32 %v68, %v160
    %v162 = vpop.f32.mrb[0].mxu0
    %v163 = vadd.f32 %v64, %v162
    %v164 = vpop.f32.mrb[0].mxu0
    %v165 = vadd.f32 %v68, %v164
    %166 = vmatprep.mubr.bf16.mxu0 0
    %167 = vmatmul.mubr.bf16.gmra.mrb[0].mxu0 %v102
    %v168 = vpop.f32.mrb[0].mxu0
    %v169 = vadd.f32 %v64, %v168
    %v170 = vpop.f32.mrb[0].mxu0
    %v171 = vadd.f32 %v68, %v170
    %v172 = vpop.f32.mrb[0].mxu0
    %v173 = vadd.f32 %v64, %v172
    %v174 = vpop.f32.mrb[0].mxu0
    %v175 = vadd.f32 %v68, %v174
    %176 = vdwg.mxu0
    %v177 = vmax.f32 %v139, 0.0
    %v178 = vmax.f32 %v141, 0.0
    %v179 = vmax.f32 %v143, 0.0
    %v180 = vmax.f32 %v145, 0.0
    %v181 = vmax.f32 %v149, 0.0
    %v182 = vmax.f32 %v151, 0.0
    %v183 = vmax.f32 %v153, 0.0
    %v184 = vmax.f32 %v155, 0.0
    %v185 = vmax.f32 %v159, 0.0
    %v186 = vmax.f32 %v161, 0.0
    %v187 = vmax.f32 %v163, 0.0
    %v188 = vmax.f32 %v165, 0.0
    %v189 = vmax.f32 %v169, 0.0
    %v190 = vmax.f32 %v171, 0.0
    %v191 = vmax.f32 %v173, 0.0
    %v192 = vmax.f32 %v175, 0.0
    %v193 = vpack.c.bf16 %v179, %v177
    %v194 = vpack.c.bf16 %v180, %v178
    %v195 = vpack.c.bf16 %v183, %v181
    %v196 = vpack.c.bf16 %v184, %v182
    %v197 = vpack.c.bf16 %v187, %v185
    %v198 = vpack.c.bf16 %v188, %v186
    %v199 = vpack.c.bf16 %v191, %v189
    %v200 = vpack.c.bf16 %v192, %v190
    %v201 = vld [vmem:[#allocation3] sm:$0xff]
    %v202 = vld [vmem:[#allocation3 + $0x8] sm:$0xff]
    %v203 = vld [vmem:[#allocation3 + $0x10] sm:$0xff]
    %v204 = vld [vmem:[#allocation3 + $0x18] sm:$0xff]
    %v205 = vld [vmem:[#allocation3 + $0x20] sm:$0xff]
    %v206 = vld [vmem:[#allocation3 + $0x28] sm:$0xff]
    %v207 = vld [vmem:[#allocation3 + $0x30] sm:$0xff]
    %v208 = vld [vmem:[#allocation3 + $0x38] sm:$0xff]
    %v209 = vld [vmem:[#allocation3 + $0x40] sm:$0xff]
    %v210 = vld [vmem:[#allocation3 + $0x48] sm:$0xff]
    %v211 = vld [vmem:[#allocation3 + $0x50] sm:$0xff]
    %v212 = vld [vmem:[#allocation3 + $0x58] sm:$0xff]
    %v213 = vld [vmem:[#allocation3 + $0x60] sm:$0xff]
    %v214 = vld [vmem:[#allocation3 + $0x68] sm:$0xff]
    %v215 = vld [vmem:[#allocation3 + $0x70] sm:$0xff]
    %v216 = vld [vmem:[#allocation3 + $0x78] sm:$0xff]
    %v217 = vld [vmem:[#allocation3 + $0x80] sm:$0xff]
    %v218 = vld [vmem:[#allocation3 + $0x88] sm:$0xff]
    %v219 = vld [vmem:[#allocation3 + $0x90] sm:$0xff]
    %v220 = vld [vmem:[#allocation3 + $0x98] sm:$0xff]
    %v221 = vld [vmem:[#allocation3 + $0xa0] sm:$0xff]
    %v222 = vld [vmem:[#allocation3 + $0xa8] sm:$0xff]
    %v223 = vld [vmem:[#allocation3 + $0xb0] sm:$0xff]
    %v224 = vld [vmem:[#allocation3 + $0xb8] sm:$0xff]
    %v225 = vld [vmem:[#allocation3 + $0xc0] sm:$0xff]
    %v226 = vld [vmem:[#allocation3 + $0xc8] sm:$0xff]
    %v227 = vld [vmem:[#allocation3 + $0xd0] sm:$0xff]
    %v228 = vld [vmem:[#allocation3 + $0xd8] sm:$0xff]
    %v229 = vld [vmem:[#allocation3 + $0xe0] sm:$0xff]
    %v230 = vld [vmem:[#allocation3 + $0xe8] sm:$0xff]
    %v231 = vld [vmem:[#allocation3 + $0xf0] sm:$0xff]
    %v232 = vld [vmem:[#allocation3 + $0xf8] sm:$0xff]
    %v233 = vld [vmem:[%s4] sm:$0x3]
    %v235 = vlaneseq
    %v236 = vshrl.u32 %v235, 7
    %v237 = vsub.s32 0, %v236
    %v238 = vrot.slane %v233, %v237
    %v239 = vlaneseq
    %v240 = vshrl.u32 %v239, 7
    %v241 = vsub.s32 1, %v240
    %v242 = vrot.slane %v233, %v241
    %v277 = vunpack.c.l.b16 %v201
    %v278 = vunpack.c.h.b16 %v201
    %v279 = vunpack.c.l.b16 %v202
    %v280 = vunpack.c.h.b16 %v202
    %v281 = vunpack.c.l.b16 %v203
    %v282 = vunpack.c.h.b16 %v203
    %v283 = vunpack.c.l.b16 %v204
    %v284 = vunpack.c.h.b16 %v204
    %v285 = vunpack.c.l.b16 %v205
    %v286 = vunpack.c.h.b16 %v205
    %v287 = vunpack.c.l.b16 %v206
    %v288 = vunpack.c.h.b16 %v206
    %v289 = vunpack.c.l.b16 %v207
    %v290 = vunpack.c.h.b16 %v207
    %v291 = vunpack.c.l.b16 %v208
    %v292 = vunpack.c.h.b16 %v208
    %v293 = vunpack.c.l.b16 %v209
    %v294 = vunpack.c.h.b16 %v209
    %v295 = vunpack.c.l.b16 %v210
    %v296 = vunpack.c.h.b16 %v210
    %v297 = vunpack.c.l.b16 %v211
    %v298 = vunpack.c.h.b16 %v211
    %v299 = vunpack.c.l.b16 %v212
    %v300 = vunpack.c.h.b16 %v212
    %v301 = vunpack.c.l.b16 %v213
    %v302 = vunpack.c.h.b16 %v213
    %v303 = vunpack.c.l.b16 %v214
    %v304 = vunpack.c.h.b16 %v214
    %v305 = vunpack.c.l.b16 %v215
    %v306 = vunpack.c.h.b16 %v215
    %v307 = vunpack.c.l.b16 %v216
    %v308 = vunpack.c.h.b16 %v216
    %v309 = vunpack.c.l.b16 %v217
    %v310 = vunpack.c.h.b16 %v217
    %v311 = vunpack.c.l.b16 %v218
    %v312 = vunpack.c.h.b16 %v218
    %v313 = vunpack.c.l.b16 %v219
    %v314 = vunpack.c.h.b16 %v219
    %v315 = vunpack.c.l.b16 %v220
    %v316 = vunpack.c.h.b16 %v220
    %v317 = vunpack.c.l.b16 %v221
    %v318 = vunpack.c.h.b16 %v221
    %v319 = vunpack.c.l.b16 %v222
    %v320 = vunpack.c.h.b16 %v222
    %v321 = vunpack.c.l.b16 %v223
    %v322 = vunpack.c.h.b16 %v223
    %v323 = vunpack.c.l.b16 %v224
    %v324 = vunpack.c.h.b16 %v224
    %v325 = vunpack.c.l.b16 %v225
    %v326 = vunpack.c.h.b16 %v225
    %v327 = vunpack.c.l.b16 %v226
    %v328 = vunpack.c.h.b16 %v226
    %v329 = vunpack.c.l.b16 %v227
    %v330 = vunpack.c.h.b16 %v227
    %v331 = vunpack.c.l.b16 %v228
    %v332 = vunpack.c.h.b16 %v228
    %v333 = vunpack.c.l.b16 %v229
    %v334 = vunpack.c.h.b16 %v229
    %v335 = vunpack.c.l.b16 %v230
    %v336 = vunpack.c.h.b16 %v230
    %v337 = vunpack.c.l.b16 %v231
    %v338 = vunpack.c.h.b16 %v231
    %v339 = vunpack.c.l.b16 %v232
    %v340 = vunpack.c.h.b16 %v232
    %v341 = vpack.c.b16 %v279, %v277
    %v342 = vpack.c.b16 %v280, %v278
    %v343 = vpack.c.b16 %v283, %v281
    %v344 = vpack.c.b16 %v284, %v282
    %v345 = vpack.c.b16 %v287, %v285
    %v346 = vpack.c.b16 %v288, %v286
    %v347 = vpack.c.b16 %v291, %v289
    %v348 = vpack.c.b16 %v292, %v290
    %v349 = vpack.c.b16 %v295, %v293
    %v350 = vpack.c.b16 %v296, %v294
    %v351 = vpack.c.b16 %v299, %v297
    %v352 = vpack.c.b16 %v300, %v298
    %v353 = vpack.c.b16 %v303, %v301
    %v354 = vpack.c.b16 %v304, %v302
    %v355 = vpack.c.b16 %v307, %v305
    %v356 = vpack.c.b16 %v308, %v306
    %v357 = vpack.c.b16 %v311, %v309
    %v358 = vpack.c.b16 %v312, %v310
    %v359 = vpack.c.b16 %v315, %v313
    %v360 = vpack.c.b16 %v316, %v314
    %v361 = vpack.c.b16 %v319, %v317
    %v362 = vpack.c.b16 %v320, %v318
    %v363 = vpack.c.b16 %v323, %v321
    %v364 = vpack.c.b16 %v324, %v322
    %v365 = vpack.c.b16 %v327, %v325
    %v366 = vpack.c.b16 %v328, %v326
    %v367 = vpack.c.b16 %v331, %v329
    %v368 = vpack.c.b16 %v332, %v330
    %v369 = vpack.c.b16 %v335, %v333
    %v370 = vpack.c.b16 %v336, %v334
    %v371 = vpack.c.b16 %v339, %v337
    %v372 = vpack.c.b16 %v340, %v338
    %405 = vmatprep.subr.bf16.mxu0 %v342
    %406 = vmatpush1.bf16.msra.mxu0 %v341
    %407 = vmatprep.subr.bf16.mxu0 %v344
    %408 = vmatpush1.bf16.msra.mxu0 %v343
    %409 = vmatprep.subr.bf16.mxu0 %v346
    %410 = vmatpush1.bf16.msra.mxu0 %v345
    %411 = vmatprep.subr.bf16.mxu0 %v348
    %412 = vmatpush1.bf16.msra.mxu0 %v347
    %413 = vmatprep.subr.bf16.mxu0 %v350
    %414 = vmatpush1.bf16.msra.mxu0 %v349
    %415 = vmatprep.subr.bf16.mxu0 %v352
    %416 = vmatpush1.bf16.msra.mxu0 %v351
    %417 = vmatprep.subr.bf16.mxu0 %v354
    %418 = vmatpush1.bf16.msra.mxu0 %v353
    %419 = vmatprep.subr.bf16.mxu0 %v356
    %420 = vmatpush1.bf16.msra.mxu0 %v355
    %421 = vmatprep.subr.bf16.mxu0 %v358
    %422 = vmatpush1.bf16.msra.mxu0 %v357
    %423 = vmatprep.subr.bf16.mxu0 %v360
    %424 = vmatpush1.bf16.msra.mxu0 %v359
    %425 = vmatprep.subr.bf16.mxu0 %v362
    %426 = vmatpush1.bf16.msra.mxu0 %v361
    %427 = vmatprep.subr.bf16.mxu0 %v364
    %428 = vmatpush1.bf16.msra.mxu0 %v363
    %429 = vmatprep.subr.bf16.mxu0 %v366
    %430 = vmatpush1.bf16.msra.mxu0 %v365
    %431 = vmatprep.subr.bf16.mxu0 %v368
    %432 = vmatpush1.bf16.msra.mxu0 %v367
    %433 = vmatprep.subr.bf16.mxu0 %v370
    %434 = vmatpush1.bf16.msra.mxu0 %v369
    %435 = vmatprep.subr.bf16.mxu0 %v372
    %436 = vmatpush1.bf16.msra.mxu0 %v371
    %437 = vmatprep.mubr.bf16.mxu0 %v194
    %438 = vmatmul.mubr.bf16.gmra.mrb[0].mxu0 %v193
    %v439 = vpop.f32.mrb[0].mxu0
    %v440 = vadd.f32 %v238, %v439
    %v441 = vpop.f32.mrb[0].mxu0
    %v442 = vadd.f32 %v242, %v441
    %v443 = vpop.f32.mrb[0].mxu0
    %v444 = vadd.f32 %v238, %v443
    %v445 = vpop.f32.mrb[0].mxu0
    %v446 = vadd.f32 %v242, %v445
    %447 = vmatprep.mubr.bf16.mxu0 %v196
    %448 = vmatmul.mubr.bf16.gmra.mrb[0].mxu0 %v195
    %v449 = vpop.f32.mrb[0].mxu0
    %v450 = vadd.f32 %v238, %v449
    %v451 = vpop.f32.mrb[0].mxu0
    %v452 = vadd.f32 %v242, %v451
    %v453 = vpop.f32.mrb[0].mxu0
    %v454 = vadd.f32 %v238, %v453
    %v455 = vpop.f32.mrb[0].mxu0
    %v456 = vadd.f32 %v242, %v455
    %457 = vmatprep.mubr.bf16.mxu0 %v198
    %458 = vmatmul.mubr.bf16.gmra.mrb[0].mxu0 %v197
    %v459 = vpop.f32.mrb[0].mxu0
    %v460 = vadd.f32 %v238, %v459
    %v461 = vpop.f32.mrb[0].mxu0
    %v462 = vadd.f32 %v242, %v461
    %v463 = vpop.f32.mrb[0].mxu0
    %v464 = vadd.f32 %v238, %v463
    %v465 = vpop.f32.mrb[0].mxu0
    %v466 = vadd.f32 %v242, %v465
    %467 = vmatprep.mubr.bf16.mxu0 %v200
    %468 = vmatmul.mubr.bf16.gmra.mrb[0].mxu0 %v199
    %v469 = vpop.f32.mrb[0].mxu0
    %v470 = vadd.f32 %v238, %v469
    %v471 = vpop.f32.mrb[0].mxu0
    %v472 = vadd.f32 %v242, %v471
    %v473 = vpop.f32.mrb[0].mxu0
    %v474 = vadd.f32 %v238, %v473
    %v475 = vpop.f32.mrb[0].mxu0
    %v476 = vadd.f32 %v242, %v475
    %477 = vdwg.mxu0
    %v478 = vmax.f32 %v440, 0.0
    %v479 = vmax.f32 %v442, 0.0
    %v480 = vmax.f32 %v444, 0.0
    %v481 = vmax.f32 %v446, 0.0
    %v482 = vmax.f32 %v450, 0.0
    %v483 = vmax.f32 %v452, 0.0
    %v484 = vmax.f32 %v454, 0.0
    %v485 = vmax.f32 %v456, 0.0
    %v486 = vmax.f32 %v460, 0.0
    %v487 = vmax.f32 %v462, 0.0
    %v488 = vmax.f32 %v464, 0.0
    %v489 = vmax.f32 %v466, 0.0
    %v490 = vmax.f32 %v470, 0.0
    %v491 = vmax.f32 %v472, 0.0
    %v492 = vmax.f32 %v474, 0.0
    %v493 = vmax.f32 %v476, 0.0
    %v494 = vld [vmem:[%s5] sm:$0x3]
    %v496 = vlaneseq
    %v497 = vshrl.u32 %v496, 7
    %v498 = vsub.s32 0, %v497
    %v499 = vrot.slane %v494, %v498
    %v500 = vlaneseq
    %v501 = vshrl.u32 %v500, 7
    %v502 = vsub.s32 1, %v501
    %v503 = vrot.slane %v494, %v502
    %v506 = vmul.f32 %v478, %v499
    %v507 = vmul.f32 %v479, %v503
    %v508 = vmul.f32 %v480, %v499
    %v509 = vmul.f32 %v481, %v503
    %v510 = vmul.f32 %v482, %v499
    %v511 = vmul.f32 %v483, %v503
    %v512 = vmul.f32 %v484, %v499
    %v513 = vmul.f32 %v485, %v503
    %v514 = vmul.f32 %v486, %v499
    %v515 = vmul.f32 %v487, %v503
    %v516 = vmul.f32 %v488, %v499
    %v517 = vmul.f32 %v489, %v503
    %v518 = vmul.f32 %v490, %v499
    %v519 = vmul.f32 %v491, %v503
    %v520 = vmul.f32 %v492, %v499
    %v521 = vmul.f32 %v493, %v503
    %v522 = vadd.f32 %v506, %v507
    %523 = vadd.xlane.f32.xlu0 %v522
    %v524 = vpop.xlane.xlu0 %523
    %v525 = vadd.f32 %v508, %v509
    %526 = vadd.xlane.f32.xlu0 %v525
    %v527 = vpop.xlane.xlu0 %526
    %v528 = vadd.f32 %v510, %v511
    %529 = vadd.xlane.f32.xlu0 %v528
    %v530 = vpop.xlane.xlu0 %529
    %v531 = vadd.f32 %v512, %v513
    %532 = vadd.xlane.f32.xlu0 %v531
    %v533 = vpop.xlane.xlu0 %532
    %v534 = vadd.f32 %v514, %v515
    %535 = vadd.xlane.f32.xlu0 %v534
    %v536 = vpop.xlane.xlu0 %535
    %v537 = vadd.f32 %v516, %v517
    %538 = vadd.xlane.f32.xlu0 %v537
    %v539 = vpop.xlane.xlu0 %538
    %v540 = vadd.f32 %v518, %v519
    %541 = vadd.xlane.f32.xlu0 %v540
    %v542 = vpop.xlane.xlu0 %541
    %v543 = vadd.f32 %v520, %v521
    %544 = vadd.xlane.f32.xlu0 %v543
    %v545 = vpop.xlane.xlu0 %544
    %v546 = vld [vmem:[#allocation2] sm:$0x1]
    %v548 = vlaneseq
    %v549 = vshrl.u32 %v548, 7
    %v550 = vsub.s32 0, %v549
    %v551 = vrot.slane %v546, %v550
    %v553 = vadd.f32 %v524, %v551
    %v554 = vadd.f32 %v527, %v551
    %v555 = vadd.f32 %v530, %v551
    %v556 = vadd.f32 %v533, %v551
    %v557 = vadd.f32 %v536, %v551
    %v558 = vadd.f32 %v539, %v551
    %v559 = vadd.f32 %v542, %v551
    %v560 = vadd.f32 %v545, %v551
    %vm561 = vcmask 7168
    %562 = vst.msk [vmem:[%s7] sm:$0xff] %vm561, %v553
    %563 = vst.msk [vmem:[%s7 + $0x8] sm:$0xff] %vm561, %v554
    %564 = vst.msk [vmem:[%s7 + $0x10] sm:$0xff] %vm561, %v555
    %565 = vst.msk [vmem:[%s7 + $0x18] sm:$0xff] %vm561, %v556
    %566 = vst.msk [vmem:[%s7 + $0x20] sm:$0xff] %vm561, %v557
    %567 = vst.msk [vmem:[%s7 + $0x28] sm:$0xff] %vm561, %v558
    %568 = vst.msk [vmem:[%s7 + $0x30] sm:$0xff] %vm561, %v559
    %569 = vst.msk [vmem:[%s7 + $0x38] sm:$0xff] %vm561, %v560
    // Predicated region
    $region34: #{tpu_custom_call.1} parent=1 // pred_check
      _
    $region35: #{tpu_custom_call.1} parent=1 // pred_check_branch
      %571 = sbr.rel (0) target = $region37
    $region36: #{tpu_custom_call.1} parent=1 // pred_region
      _
    $region37: #{tpu_custom_call.1} parent=1 // pred_fallthru
      _
    // Predicated region
    $region38: #{tpu_custom_call.1} parent=1 // pred_check
      _
    $region39: #{tpu_custom_call.1} parent=1 // pred_check_branch
      %573 = sbr.rel (0) target = $region41
    $region40: #{tpu_custom_call.1} parent=1 // pred_region
      _
    $region41: #{tpu_custom_call.1} parent=1 // pred_fallthru
      _
    %574 = vsyncpa [#allocation4], 1

</llo_original>
